<compile_context>
chip_gen: v6e
topology: v6e:2x2x1
jax: 0.10.0
libtpu: 0.0.40
codegen_flags: <defaults>
</compile_context>

<pallas_src>
import numpy as np
import jax
import jax.numpy as jnp
from jax import lax
from jax.experimental import pallas as pl
from jax.experimental.pallas import tpu as pltpu

B = 8          # batch (== sublane count -> every tile is full)
D_IN = 128     # Linear in_features (== lane count)
D_OUT = 2      # Linear out_features (binary classification)

OUT_ROWS = 8   # packed output block: one full (8, 128) f32 vreg tile
OUT_LANES = 128
assert B == OUT_ROWS


def _lossa_kernel(x_ref, w_ref, y_ref, b_ref, out_ref):
    x = x_ref[...]                                   # (B, 128) f32
    w = w_ref[...]                                   # (2, 128) f32  (out, in)
    y = y_ref[...]                                   # (B, 1)  f32 labels in {0., 1.}

    # FC layer without the MXU: logits_c = sum_k x[:,k] * w[c,k] + b[c]
    l0 = jnp.sum(x * w[0:1, :], axis=-1, keepdims=True) + b_ref[0]   # (B, 1)
    l1 = jnp.sum(x * w[1:2, :], axis=-1, keepdims=True) + b_ref[1]   # (B, 1)

    # pairwise numerically-stable softmax / log-softmax (no 2-wide class axis)
    m = jnp.maximum(l0, l1)
    e0 = jnp.exp(l0 - m)
    e1 = jnp.exp(l1 - m)
    s = e0 + e1
    inv_s = pl.reciprocal(s, approx=False)           # exact (probs checked to 1e-5)
    p0 = e0 * inv_s
    p1 = e1 * inv_s
    log_s = jnp.log(s)
    lp0 = (l0 - m) - log_s                           # log softmax, class 0
    lp1 = (l1 - m) - log_s                           # log softmax, class 1

    # per-row NLL; prediction from the logits (torch.max tie-break -> class 0)
    nll = -(y * lp1 + (1.0 - y) * lp0)               # (B, 1)
    pred_f = (l1 > l0).astype(jnp.float32)           # (B, 1)
    hit = (pred_f == y).astype(jnp.float32)          # (B, 1) exact 0/1 compare

    lane = lax.broadcasted_iota(jnp.int32, (OUT_ROWS, OUT_LANES), 1)
    row = lax.broadcasted_iota(jnp.int32, (OUT_ROWS, OUT_LANES), 0)

    # combined batch reduction: scaled NLL in lane 0, hit count in lane 1,
    # a single sublane-sum produces both scalars.
    red_src = jnp.where(lane == 0, nll * (1.0 / B),
              jnp.where(lane == 1, hit, 0.0))        # (8, 128)
    red = jnp.sum(red_src, axis=0, keepdims=True)    # (1, 128)
    loss_11 = red[:, 0:1]                            # (1, 1)
    correct_11 = red[:, 1:2]                         # (1, 1)

    # assemble the single lane-dense output block (one unmasked store + DMA)
    packed = jnp.where(lane == 0, p0,
             jnp.where(lane == 1, p1,
             jnp.where(lane == 2, pred_f,
             jnp.where((row == 0) & (lane == 3), loss_11,
             jnp.where((row == 0) & (lane == 4), correct_11, 0.0)))))
    out_ref[...] = packed


def _run_kernel(x2d, w, y_col, bias):
    return pl.pallas_call(
        _lossa_kernel,
        out_shape=jax.ShapeDtypeStruct((OUT_ROWS, OUT_LANES), jnp.float32),
        grid=(),
        in_specs=[
            pl.BlockSpec((B, D_IN), lambda: (0, 0)),          # x
            pl.BlockSpec((D_OUT, D_IN), lambda: (0, 0)),      # weight (out, in)
            pl.BlockSpec((B, 1), lambda: (0, 0)),             # labels as f32 column
            pl.BlockSpec(memory_space=pltpu.MemorySpace.SMEM),  # bias (2,) scalars
        ],
        out_specs=pl.BlockSpec((OUT_ROWS, OUT_LANES), lambda: (0, 0)),
    )(x2d, w, y_col, bias)


class LossAPallas:
    """JAX/Pallas re-implementation of the PyTorch lossA module (forward only)."""

    def __init__(self, key):
        kw, kb = jax.random.split(key)
        # nn.Linear(128, 2): weight (out, in), bias (out,). Deterministic init.
        bound = 1.0 / np.sqrt(D_IN)
        self.weight = jax.random.uniform(
            kw, (D_OUT, D_IN), jnp.float32, minval=-bound, maxval=bound)
        self.bias = jax.random.uniform(
            kb, (D_OUT,), jnp.float32, minval=-bound, maxval=bound)

    def __call__(self, x, labels=None):
        # x: (B, 1, 128) -> squeeze(1) -> (B, 128)
        x2d = jnp.squeeze(x, axis=1).astype(jnp.float32)
        if labels is None:
            y_col = jnp.zeros((B, 1), jnp.float32)
        else:
            y_col = labels.astype(jnp.float32).reshape(B, 1)

        packed = _run_kernel(x2d, self.weight, y_col, self.bias)

        probs = packed[:B, 0:2]                       # (B, 2)
        if labels is None:
            # predScore = softmax(x)[:, 1].detach().cpu().numpy()
            return np.asarray(jax.device_get(probs[:, 1]))
        pred = packed[:B, 2].astype(jnp.int32)        # (B,)
        nloss = packed[0, 3]
        correct = packed[0, 4]
        return (nloss, probs, pred, correct)


if __name__ == "__main__":
    key = jax.random.PRNGKey(0)
    k_x, k_lbl, k_params = jax.random.split(key, 3)

    x = jax.random.normal(k_x, (B, 1, D_IN), jnp.float32)
    labels = jax.random.randint(k_lbl, (B,), 0, D_OUT, jnp.int32)

    model = LossAPallas(k_params)

    # labelled path: (nloss, softmax(x), predLabel, correctNum)
    nloss, probs, pred, correct = model(x, labels)
    jax.block_until_ready((nloss, probs, pred, correct))

    # unlabelled path: predScore as numpy
    pred_score = model(x)

    # cross-check against a plain-JAX reference
    x2d = jnp.squeeze(x, axis=1)
    logits_ref = x2d @ model.weight.T + model.bias
    probs_ref = jax.nn.softmax(logits_ref, axis=-1)
    loss_ref = -jnp.mean(
        jnp.take_along_axis(jax.nn.log_softmax(logits_ref, -1),
                            labels[:, None], axis=1)[:, 0])
    pred_ref = jnp.argmax(probs_ref, axis=-1).astype(jnp.int32)
    correct_ref = jnp.sum((pred_ref == labels).astype(jnp.float32))

    assert np.allclose(np.asarray(probs), np.asarray(probs_ref), atol=1e-5)
    assert np.allclose(float(nloss), float(loss_ref), atol=1e-5)
    assert np.array_equal(np.asarray(pred), np.asarray(pred_ref))
    assert float(correct) == float(correct_ref)
    assert np.allclose(pred_score, np.asarray(probs_ref[:, 1]), atol=1e-5)

    print("KERNEL_OK")
</pallas_src>

<mosaic_0001>
module attributes {stable_mosaic.version = 11 : i64} {
  func.func @_lossa_kernel(%arg0: memref<8x128xf32, #tpu.memory_space<vmem>>, %arg1: memref<2x128xf32, #tpu.memory_space<vmem>>, %arg2: memref<8x1xf32, #tpu.memory_space<vmem>>, %arg3: memref<2xf32, #tpu.memory_space<smem>>, %arg4: memref<8x128xf32, #tpu.memory_space<vmem>>) attributes {dimension_semantics = [], scalar_prefetch = 0 : i64, scratch_operands = 0 : i64, tpu.core_type = #tpu.core_type<tc>} {
    %c0 = arith.constant 0 : index
    %c0_0 = arith.constant 0 : index
    %0 = vector.load %arg0[%c0, %c0_0] : memref<8x128xf32, #tpu.memory_space<vmem>>, vector<8x128xf32>
    %c0_1 = arith.constant 0 : index
    %c0_2 = arith.constant 0 : index
    %1 = vector.load %arg1[%c0_1, %c0_2] : memref<2x128xf32, #tpu.memory_space<vmem>>, vector<2x128xf32>
    %c0_3 = arith.constant 0 : index
    %c0_4 = arith.constant 0 : index
    %2 = vector.load %arg2[%c0_3, %c0_4] : memref<8x1xf32, #tpu.memory_space<vmem>>, vector<8x1xf32>
    %3 = vector.extract_strided_slice %1 {offsets = [0, 0], sizes = [1, 128], strides = [1, 1]} : vector<2x128xf32> to vector<1x128xf32>
    %4 = vector.broadcast %3 : vector<1x128xf32> to vector<8x128xf32>
    %5 = arith.mulf %0, %4 : vector<8x128xf32>
    %cst = arith.constant dense<0.000000e+00> : vector<8xf32>
    %6 = vector.multi_reduction <add>, %5, %cst [1] : vector<8x128xf32> to vector<8xf32>
    %7 = vector.shape_cast %6 : vector<8xf32> to vector<8x1xf32>
    %c0_5 = arith.constant 0 : index
    %8 = memref.load %arg3[%c0_5] : memref<2xf32, #tpu.memory_space<smem>>
    %9 = vector.broadcast %8 : f32 to vector<8x1xf32>
    %10 = arith.addf %7, %9 : vector<8x1xf32>
    %11 = vector.extract_strided_slice %1 {offsets = [1, 0], sizes = [1, 128], strides = [1, 1]} : vector<2x128xf32> to vector<1x128xf32>
    %12 = vector.broadcast %11 : vector<1x128xf32> to vector<8x128xf32>
    %13 = arith.mulf %0, %12 : vector<8x128xf32>
    %cst_6 = arith.constant dense<0.000000e+00> : vector<8xf32>
    %14 = vector.multi_reduction <add>, %13, %cst_6 [1] : vector<8x128xf32> to vector<8xf32>
    %15 = vector.shape_cast %14 : vector<8xf32> to vector<8x1xf32>
    %c1 = arith.constant 1 : index
    %16 = memref.load %arg3[%c1] : memref<2xf32, #tpu.memory_space<smem>>
    %17 = vector.broadcast %16 : f32 to vector<8x1xf32>
    %18 = arith.addf %15, %17 : vector<8x1xf32>
    %19 = arith.maximumf %10, %18 : vector<8x1xf32>
    %20 = arith.subf %10, %19 : vector<8x1xf32>
    %21 = math.exp %20 : vector<8x1xf32>
    %22 = arith.subf %18, %19 : vector<8x1xf32>
    %23 = math.exp %22 : vector<8x1xf32>
    %24 = arith.addf %21, %23 : vector<8x1xf32>
    %25 = tpu.reciprocal %24 : vector<8x1xf32> -> vector<8x1xf32>
    %26 = arith.mulf %21, %25 : vector<8x1xf32>
    %27 = arith.mulf %23, %25 : vector<8x1xf32>
    %28 = math.log %24 : vector<8x1xf32>
    %29 = arith.subf %10, %19 : vector<8x1xf32>
    %30 = arith.subf %29, %28 : vector<8x1xf32>
    %31 = arith.subf %18, %19 : vector<8x1xf32>
    %32 = arith.subf %31, %28 : vector<8x1xf32>
    %33 = arith.mulf %2, %32 : vector<8x1xf32>
    %cst_7 = arith.constant 1.000000e+00 : f32
    %34 = vector.broadcast %cst_7 : f32 to vector<8x1xf32>
    %35 = arith.subf %34, %2 : vector<8x1xf32>
    %36 = arith.mulf %35, %30 : vector<8x1xf32>
    %37 = arith.addf %33, %36 : vector<8x1xf32>
    %cst_8 = arith.constant 0.000000e+00 : f32
    %38 = vector.broadcast %cst_8 : f32 to vector<8x1xf32>
    %39 = arith.subf %38, %37 : vector<8x1xf32>
    %40 = arith.cmpf ogt, %18, %10 : vector<8x1xf32>
    %41 = arith.extui %40 : vector<8x1xi1> to vector<8x1xi32>
    %42 = arith.sitofp %41 : vector<8x1xi32> to vector<8x1xf32>
    %43 = arith.cmpf oeq, %42, %2 : vector<8x1xf32>
    %44 = arith.extui %43 : vector<8x1xi1> to vector<8x1xi32>
    %45 = arith.sitofp %44 : vector<8x1xi32> to vector<8x1xf32>
    %46 = tpu.iota {dimensions = array<i32: 1>} : vector<8x128xi32>
    %47 = tpu.iota {dimensions = array<i32: 0>} : vector<8x128xi32>
    %c0_i32 = arith.constant 0 : i32
    %48 = vector.broadcast %c0_i32 : i32 to vector<8x128xi32>
    %49 = arith.cmpi eq, %46, %48 : vector<8x128xi32>
    %cst_9 = arith.constant 1.250000e-01 : f32
    %50 = vector.broadcast %cst_9 : f32 to vector<8x1xf32>
    %51 = arith.mulf %39, %50 : vector<8x1xf32>
    %c1_i32 = arith.constant 1 : i32
    %52 = vector.broadcast %c1_i32 : i32 to vector<8x128xi32>
    %53 = arith.cmpi eq, %46, %52 : vector<8x128xi32>
    %cst_10 = arith.constant 0.000000e+00 : f32
    %54 = vector.shape_cast %45 : vector<8x1xf32> to vector<8x1xf32>
    %55 = vector.broadcast %54 : vector<8x1xf32> to vector<8x128xf32>
    %56 = vector.broadcast %cst_10 : f32 to vector<8x128xf32>
    %57 = arith.select %53, %55, %56 : vector<8x128xi1>, vector<8x128xf32>
    %58 = vector.shape_cast %51 : vector<8x1xf32> to vector<8x1xf32>
    %59 = vector.broadcast %58 : vector<8x1xf32> to vector<8x128xf32>
    %60 = arith.select %49, %59, %57 : vector<8x128xi1>, vector<8x128xf32>
    %cst_11 = arith.constant dense<0.000000e+00> : vector<128xf32>
    %61 = vector.multi_reduction <add>, %60, %cst_11 [0] : vector<8x128xf32> to vector<128xf32>
    %62 = vector.shape_cast %61 : vector<128xf32> to vector<1x128xf32>
    %63 = vector.extract_strided_slice %62 {offsets = [0, 0], sizes = [1, 1], strides = [1, 1]} : vector<1x128xf32> to vector<1x1xf32>
    %64 = vector.extract_strided_slice %62 {offsets = [0, 1], sizes = [1, 1], strides = [1, 1]} : vector<1x128xf32> to vector<1x1xf32>
    %c0_i32_12 = arith.constant 0 : i32
    %65 = vector.broadcast %c0_i32_12 : i32 to vector<8x128xi32>
    %66 = arith.cmpi eq, %46, %65 : vector<8x128xi32>
    %c1_i32_13 = arith.constant 1 : i32
    %67 = vector.broadcast %c1_i32_13 : i32 to vector<8x128xi32>
    %68 = arith.cmpi eq, %46, %67 : vector<8x128xi32>
    %c2_i32 = arith.constant 2 : i32
    %69 = vector.broadcast %c2_i32 : i32 to vector<8x128xi32>
    %70 = arith.cmpi eq, %46, %69 : vector<8x128xi32>
    %c0_i32_14 = arith.constant 0 : i32
    %71 = vector.broadcast %c0_i32_14 : i32 to vector<8x128xi32>
    %72 = arith.cmpi eq, %47, %71 : vector<8x128xi32>
    %c3_i32 = arith.constant 3 : i32
    %73 = vector.broadcast %c3_i32 : i32 to vector<8x128xi32>
    %74 = arith.cmpi eq, %46, %73 : vector<8x128xi32>
    %75 = arith.andi %72, %74 : vector<8x128xi1>
    %c0_i32_15 = arith.constant 0 : i32
    %76 = vector.broadcast %c0_i32_15 : i32 to vector<8x128xi32>
    %77 = arith.cmpi eq, %47, %76 : vector<8x128xi32>
    %c4_i32 = arith.constant 4 : i32
    %78 = vector.broadcast %c4_i32 : i32 to vector<8x128xi32>
    %79 = arith.cmpi eq, %46, %78 : vector<8x128xi32>
    %80 = arith.andi %77, %79 : vector<8x128xi1>
    %cst_16 = arith.constant 0.000000e+00 : f32
    %81 = vector.shape_cast %64 : vector<1x1xf32> to vector<1x1xf32>
    %82 = vector.broadcast %81 : vector<1x1xf32> to vector<8x128xf32>
    %83 = vector.broadcast %cst_16 : f32 to vector<8x128xf32>
    %84 = arith.select %80, %82, %83 : vector<8x128xi1>, vector<8x128xf32>
    %85 = vector.shape_cast %63 : vector<1x1xf32> to vector<1x1xf32>
    %86 = vector.broadcast %85 : vector<1x1xf32> to vector<8x128xf32>
    %87 = arith.select %75, %86, %84 : vector<8x128xi1>, vector<8x128xf32>
    %88 = vector.shape_cast %42 : vector<8x1xf32> to vector<8x1xf32>
    %89 = vector.broadcast %88 : vector<8x1xf32> to vector<8x128xf32>
    %90 = arith.select %70, %89, %87 : vector<8x128xi1>, vector<8x128xf32>
    %91 = vector.shape_cast %27 : vector<8x1xf32> to vector<8x1xf32>
    %92 = vector.broadcast %91 : vector<8x1xf32> to vector<8x128xf32>
    %93 = arith.select %68, %92, %90 : vector<8x128xi1>, vector<8x128xf32>
    %94 = vector.shape_cast %26 : vector<8x1xf32> to vector<8x1xf32>
    %95 = vector.broadcast %94 : vector<8x1xf32> to vector<8x128xf32>
    %96 = arith.select %66, %95, %93 : vector<8x128xi1>, vector<8x128xf32>
    %c0_17 = arith.constant 0 : index
    %c0_18 = arith.constant 0 : index
    %97 = vector.load %arg4[%c0_17, %c0_18] : memref<8x128xf32, #tpu.memory_space<vmem>>, vector<8x128xf32>
    tpu.vector_store %arg4[%c0_17, %c0_18], %96 {strides = array<i32>} : memref<8x128xf32, #tpu.memory_space<vmem>>, vector<8x128xf32>,
    return
  }
}

</mosaic_0001>

<llo_original>
// kernel: tpu_custom_call.1
$region0: #{tpu_custom_call.1}
  #allocation0 [shape = 'u32[]', space=smem, size = 0x4, offset = 0x4, fixed_abs, tag = 'smem constant byte address 0x4 - core index']
  #allocation1 [shape = 'u32[144,128]{1,0:T(1,128)}', space=vmem, size = 0x12000, scoped, tag = 'internal scratch']
  %s0 = inlined_call_operand.vmem [shape: f32[8,128], index: 0, kind: input, shape index: {}]
  %s1 = inlined_call_operand.vmem [shape: f32[2,128], index: 1, kind: input, shape index: {}]
  %s2 = inlined_call_operand.vmem [shape: f32[8,1], index: 2, kind: input, shape index: {}]
  %s3 = inlined_call_operand.vmem [shape: f32[2], index: 3, kind: input, shape index: {}]
  %s4 = inlined_call_operand.hbm [shape: f32[8,128], index: 4, kind: output, shape index: {}]
  %s5 = sld [smem:[#allocation0]]
  $region30: #{tpu_custom_call.1} parent=0
    _
  %s7 = ssub.s32 1, %s5
  %s8 = scalar_select 0, %s7, %s5
  $region1: #{tpu_custom_call.1} parent=0
    #allocation2 [shape = 'u8[512]{0}', space=smem, size = 0x200, scoped, tag = 'input window, operand 3, single buffered']
    #allocation3 [shape = 's32[1]{0}', space=sflag, size = 0x4, scoped, tag = 'scoped memory for tpu_custom_call.1']
    #allocation4 [shape = 's32[1]{0}', space=sflag, size = 0x4, scoped, tag = 'scoped memory for tpu_custom_call.1']
    #allocation5 [shape = 'u8[4096]{0}', space=vmem, size = 0x1000, scoped, tag = 'output window, operand 0, single buffered']
    %9 = vsyncpa [#allocation4], 0
    %10 = vsyncpa [#allocation3], 0
    // Predicated region
    $region2: #{tpu_custom_call.1} parent=1 // pred_check
      _
    $region3: #{tpu_custom_call.1} parent=1 // pred_check_branch
      %12 = sbr.rel (0) target = $region5
    $region4: #{tpu_custom_call.1} parent=1 // pred_region
      _
    $region5: #{tpu_custom_call.1} parent=1 // pred_fallthru
      _
    // Predicated region
    $region6: #{tpu_custom_call.1} parent=1 // pred_check
      _
    $region7: #{tpu_custom_call.1} parent=1 // pred_check_branch
      %14 = sbr.rel (0) target = $region9
    $region8: #{tpu_custom_call.1} parent=1 // pred_region
      _
    $region9: #{tpu_custom_call.1} parent=1 // pred_fallthru
      _
    // Predicated region
    $region10: #{tpu_custom_call.1} parent=1 // pred_check
      _
    $region11: #{tpu_custom_call.1} parent=1 // pred_check_branch
      %16 = sbr.rel (0) target = $region13
    $region12: #{tpu_custom_call.1} parent=1 // pred_region
      _
    $region13: #{tpu_custom_call.1} parent=1 // pred_fallthru
      _
    // Predicated region
    $region14: #{tpu_custom_call.1} parent=1 // pred_check
      _
    $region15: #{tpu_custom_call.1} parent=1 // pred_check_branch
      %18 = sbr.rel (0) target = $region17
    $region16: #{tpu_custom_call.1} parent=1 // pred_region
      %s20 = ssub.s32 16, 16
      %21 = vsyncadd [#allocation4], %s20
      %s23 = sshll.u32 %s3, 4
      %s24 = int_to_ptr.vmem [resolvable:$true] %s23
      %26 = dma.vmem_to_smem %s24, 16, [#allocation2], [#allocation4]
    $region17: #{tpu_custom_call.1} parent=1 // pred_fallthru
      _
    // Predicated region
    $region18: #{tpu_custom_call.1} parent=1 // pred_check
      _
    $region19: #{tpu_custom_call.1} parent=1 // pred_check_branch
      %28 = sbr.rel (0) target = $region21
    $region20: #{tpu_custom_call.1} parent=1 // pred_region
      %29 = dma.done [#allocation4], 16
    $region21: #{tpu_custom_call.1} parent=1 // pred_fallthru
      _
    %30 = sfence
    %v31 = vld [vmem:[%s0] sm:$0xff]
    %v32 = vld [vmem:[%s1] sm:$0x3]
    %v33 = vld [vmem:[%s2] sm:$0xff]
    %v34 = vlaneseq
    %v35 = vshrl.u32 %v34, 7
    %v36 = vsub.s32 0, %v35
    %v37 = vrot.slane %v32, %v36
    %v38 = vmul.f32 %v31, %v37
    %39 = vadd.xlane.f32.xlu0 %v38
    %v40 = vpop.xlane.xlu0 %39
    %s41 = sld [smem:[#allocation2]]
    %v42 = vstv %s41
    %v43 = vadd.f32 %v40, %v42
    %v44 = vlaneseq
    %v45 = vshrl.u32 %v44, 7
    %v46 = vsub.s32 1, %v45
    %v47 = vrot.slane %v32, %v46
    %v48 = vmul.f32 %v31, %v47
    %49 = vadd.xlane.f32.xlu0 %v48
    %v50 = vpop.xlane.xlu0 %49
    %s51 = sld [smem:[#allocation2 + $0x1]]
    %v52 = vstv %s51
    %v53 = vadd.f32 %v50, %v52
    %v54 = vmax.f32 %v43, %v53
    %v55 = vsub.f32 %v43, %v54
    %v56 = vmul.f32 %v55, 1.442695
    %v57 = vpow.pop %v56
    %v58 = vsub.f32 %v53, %v54
    %v59 = vmul.f32 %v58, 1.442695
    %v60 = vpow.pop %v59
    %v61 = vadd.f32 %v57, %v60
    %v62 = vrcp.pop %v61
    %v63 = vmul.f32 %v57, %v62
    %v64 = vmul.f32 %v60, %v62
    %v65 = vlog2.pop %v61
    %v66 = vmul.f32 %v65, 0.6931472
    %v67 = vsub.f32 %v55, %v66
    %v68 = vsub.f32 %v58, %v66
    %v69 = vmul.f32 %v33, %v68
    %v70 = vsub.f32 1.0, %v33
    %v71 = vmul.f32 %v70, %v67
    %v72 = vadd.f32 %v69, %v71
    %v73 = vsub.f32 0.0, %v72
    %vm74 = vcmp.gt.f32.partialorder %v53, %v43
    %v75 = vsel %vm74, 1, 0
    %v76 = vcvt.s32.f32 %v75
    %vm77 = vcmp.eq.f32.partialorder %v76, %v33
    %v78 = vsel %vm77, 1, 0
    %v79 = vcvt.s32.f32 %v78
    %v80 = vlaneseq
    %v81 = vand.u32 %v80, 127
    %v82 = vlaneseq
    %v83 = vshrl.u32 %v82, 7
    %vm84 = vcmp.eq.s32.totalorder %v81, 0
    %v85 = vmul.f32 %v73, 0.125
    %vm86 = vcmp.eq.s32.totalorder %v81, 1
    %88 = vset.pattern.permute.xlu0 0
    %89 = vperm.xlu0 %88, %v79
    %v90 = vpop.permute.xlu0 %89
    %v92 = vsel %vm86, %v90, 0.0
    %94 = vset.pattern.permute.xlu0 0
    %95 = vperm.xlu0 %94, %v85
    %v96 = vpop.permute.xlu0 %95
    %v98 = vsel %vm84, %v96, %v92
    %v99 = vrot.slane %v98, 4
    %v100 = vadd.f32 %v98, %v99
    %v101 = vrot.slane %v100, 2
    %v102 = vadd.f32 %v100, %v101
    %v103 = vrot.slane %v102, 1
    %v104 = vadd.f32 %v102, %v103
    %vm105 = vcmp.eq.s32.totalorder %v81, 2
    %vm106 = vcmp.eq.s32.totalorder %v83, 0
    %vm107 = vcmp.eq.s32.totalorder %v81, 3
    %vm108 = vmand %vm106, %vm107
    %vm109 = vcmp.eq.s32.totalorder %v81, 4
    %vm110 = vmand %vm106, %vm109
    %112 = vset.pattern.permute.xlu0 1
    %113 = vperm.xlu0 %112, %v104
    %v114 = vpop.permute.xlu0 %113
    %v116 = vsel %vm110, %v114, 0.0
    %117 = vset.pattern.permute.xlu0 0
    %118 = vperm.xlu0 %117, %v104
    %v119 = vpop.permute.xlu0 %118
    %v121 = vsel %vm108, %v119, %v116
    %v122 = vsel %vm105, %v76, %v121
    %v123 = vsel %vm86, %v64, %v122
    %v124 = vsel %vm84, %v63, %v123
    %125 = vst [vmem:[#allocation5] sm:$0xff] %v124
    // Predicated region
    $region22: #{tpu_custom_call.1} parent=1 // pred_check
      _
    $region23: #{tpu_custom_call.1} parent=1 // pred_check_branch
      %127 = sbr.rel (0) target = $region25
    $region24: #{tpu_custom_call.1} parent=1 // pred_region
      %s129 = ssub.s32 128, 128
      %130 = vsyncadd [#allocation3], %s129
      %s132 = sshll.u32 [#allocation5], 4
      %s133 = int_to_ptr.vmem [resolvable:$true] %s132
      %135 = dma.vmem_to_hbm [thread:$0]  %s133, 128, %s4, [#allocation3]
    $region25: #{tpu_custom_call.1} parent=1 // pred_fallthru
      _
    // Predicated region
    $region26: #{tpu_custom_call.1} parent=1 // pred_check
      _
    $region27: #{tpu_custom_call.1} parent=1 // pred_check_branch
      %137 = sbr.rel (0) target = $region29
    $region28: #{tpu_custom_call.1} parent=1 // pred_region
      %138 = dma.done [#allocation3], 128
    $region29: #{tpu_custom_call.1} parent=1 // pred_fallthru
      _
    %139 = vsyncpa [#allocation3], 1
    %140 = vsyncpa [#allocation4], 1

</llo_original>
